<compile_context>
chip_gen: v6e
topology: v6e:2x2x1
jax: 0.10.0
libtpu: 0.0.40
codegen_flags: <defaults>
</compile_context>

<pallas_src>
import jax
import jax.numpy as jnp
from jax.experimental import pallas as pl
from jax.experimental.pallas import tpu as pltpu

RHO_PAD = 128  # lane-dense width for the padded rho output head


def _aga_kernel(x_ref,
                w1_ref, b1_ref, w2_ref, b2_ref,          # phi encoder
                w3_ref, b3_ref, w4_ref, b4_ref,          # phi decoder
                wr1_ref, br1_ref, wr2_ref, br2_ref,      # rho regressor (wr2/br2 lane-padded)
                phi_out_ref, rho_out_ref):
    # x and weights arrive in bf16 (MXU-native operands); biases, accumulation
    # and the ReLU/bias elementwise path stay in f32 (safe on v5e's f32-only VPU).
    x = x_ref[...]

    def mm(a_bf16, w_ref, b_ref):
        return jnp.dot(a_bf16, w_ref[...],
                       preferred_element_type=jnp.float32) + b_ref[...]

    relu = lambda v: jnp.maximum(v, 0.0)

    # ---- phi: encoder ----
    h = relu(mm(x, w1_ref, b1_ref))
    h = relu(mm(h.astype(jnp.bfloat16), w2_ref, b2_ref))
    # ---- phi: decoder ----
    h = relu(mm(h.astype(jnp.bfloat16), w3_ref, b3_ref))
    phi = relu(mm(h.astype(jnp.bfloat16), w4_ref, b4_ref))
    phi_out_ref[...] = phi.astype(phi_out_ref.dtype)

    # ---- rho(phi(x)) ----  (wr2/br2 are lane-padded to RHO_PAD; column 0 is real)
    r = relu(mm(phi.astype(jnp.bfloat16), wr1_ref, br1_ref))
    rho = mm(r.astype(jnp.bfloat16), wr2_ref, br2_ref)
    rho_out_ref[...] = rho.astype(rho_out_ref.dtype)


def aga_encoder_decoder(x, params, *, block_m=256):
    """AGAEncoderDecoder.forward: returns [phi(x), rho(phi(x))]."""
    (w1, b1, w2, b2, w3, b3, w4, b4, wr1, br1, wr2, br2) = params
    B, dim = x.shape
    d2, d4 = w1.shape[1], w2.shape[1]

    # Lane-dense padding for the degenerate (d2, 1) rho head.
    wr2_pad = jnp.zeros((d2, RHO_PAD), jnp.float32).at[:, :wr2.shape[1]].set(wr2)
    br2_pad = jnp.zeros((1, RHO_PAD), jnp.float32).at[:, :br2.shape[1]].set(br2)

    # bf16 weights / input (f32 MXU accumulation); biases stay f32.
    bf16 = jnp.bfloat16
    w1b, w2b, w3b, w4b, wr1b, wr2b = (a.astype(bf16) for a in
                                      (w1, w2, w3, w4, wr1, wr2_pad))
    b1f, b2f, b3f, b4f, br1f, br2f = (a.astype(jnp.float32) for a in
                                      (b1, b2, b3, b4, br1, br2_pad))

    # Batch tiling: pad rows up to a tile multiple (>= 8 sublanes).
    tm = block_m if B > block_m else max(8, -(-B // 8) * 8)
    Bp = -(-B // tm) * tm
    xb = x.astype(bf16)
    if Bp != B:
        xb = jnp.pad(xb, ((0, Bp - B), (0, 0)))
    grid = (Bp // tm,)

    def batch_spec(cols):
        return pl.BlockSpec((tm, cols), lambda i: (i, 0))

    def const_spec(a):
        return pl.BlockSpec(a.shape, lambda i: (0, 0))  # weight-stationary

    inputs = (xb,
              w1b, b1f, w2b, b2f, w3b, b3f, w4b, b4f,
              wr1b, br1f, wr2b, br2f)
    in_specs = [batch_spec(dim)] + [const_spec(a) for a in inputs[1:]]
    out_specs = (batch_spec(dim), batch_spec(RHO_PAD))
    out_shape = (jax.ShapeDtypeStruct((Bp, dim), jnp.float32),
                 jax.ShapeDtypeStruct((Bp, RHO_PAD), jnp.float32))

    # VMEM budget sized from the real footprint (params resident, tiles
    # double-buffered), with headroom; clamped to stay within physical VMEM.
    param_bytes = sum(a.size * a.dtype.itemsize for a in inputs[1:])
    tile_bytes = 2 * (tm * dim * 2        # x tile (bf16), double-buffered
                      + tm * dim * 4      # phi tile (f32), double-buffered
                      + tm * RHO_PAD * 4)  # rho tile (f32), double-buffered
    vmem_limit = int(min(max(2 * param_bytes + tile_bytes + (4 << 20), 16 << 20),
                         96 << 20))
    # TODO(synk): at the production dim=4096 on v7x (64 MiB VMEM/TC) the bf16
    # weights (~56 MiB) no longer fit resident; stream w1/w4/wr1 in K-chunks
    # from HBM (memory_space=pl.ANY + emit_pipeline) instead of const_spec.

    flops = 2 * Bp * (dim * d2 + d2 * d4 + d4 * d2 + d2 * dim
                      + dim * d2 + d2 * RHO_PAD)
    bytes_accessed = (param_bytes + xb.size * xb.dtype.itemsize
                      + Bp * dim * 4 + Bp * RHO_PAD * 4)

    phi_out, rho_out = pl.pallas_call(
        _aga_kernel,
        out_shape=out_shape,
        grid=grid,
        in_specs=in_specs,
        out_specs=out_specs,
        compiler_params=pltpu.CompilerParams(
            dimension_semantics=("parallel",),
            vmem_limit_bytes=vmem_limit),
        cost_estimate=pl.CostEstimate(
            flops=flops, transcendentals=0, bytes_accessed=bytes_accessed),
    )(*inputs)

    return [phi_out[:B], rho_out[:B, :1]]


def make_params(dim, key):
    """Deterministic parameter init (PyTorch nn.Linear style uniform)."""
    def linear(k, fan_in, fan_out):
        kw, kb = jax.random.split(k)
        bound = 1.0 / jnp.sqrt(jnp.asarray(fan_in, jnp.float32))
        w = jax.random.uniform(kw, (fan_in, fan_out), jnp.float32, -bound, bound)
        b = jax.random.uniform(kb, (1, fan_out), jnp.float32, -bound, bound)
        return w, b

    d2, d4 = dim // 2, dim // 4
    keys = jax.random.split(key, 6)
    w1, b1 = linear(keys[0], dim, d2)    # phi.encoder Linear(dim, dim/2)
    w2, b2 = linear(keys[1], d2, d4)     # phi.encoder Linear(dim/2, dim/4)
    w3, b3 = linear(keys[2], d4, d2)     # phi.decoder Linear(dim/4, dim/2)
    w4, b4 = linear(keys[3], d2, dim)    # phi.decoder Linear(dim/2, dim)
    wr1, br1 = linear(keys[4], dim, d2)  # rho Linear(dim, dim/2)
    wr2, br2 = linear(keys[5], d2, 1)    # rho Linear(dim/2, 1)
    return (w1, b1, w2, b2, w3, b3, w4, b4, wr1, br1, wr2, br2)


def _reference(x, params):
    (w1, b1, w2, b2, w3, b3, w4, b4, wr1, br1, wr2, br2) = params
    relu = lambda v: jnp.maximum(v, 0.0)
    h = relu(x @ w1 + b1)
    h = relu(h @ w2 + b2)
    h = relu(h @ w3 + b3)
    phi = relu(h @ w4 + b4)
    r = relu(phi @ wr1 + br1)
    rho = r @ wr2 + br2
    return [phi, rho]


if __name__ == "__main__":
    B, DIM = 8, 128  # small synthetic shapes (original AGA uses dim=4096)
    key = jax.random.PRNGKey(0)
    kx, kp = jax.random.split(key)
    x = jax.random.normal(kx, (B, DIM), jnp.float32)
    params = make_params(DIM, kp)

    phi_out, rho_out = aga_encoder_decoder(x, params)
    jax.block_until_ready(phi_out)
    jax.block_until_ready(rho_out)

    # correctness check against f32 pure-JAX reference
    # (tolerance loosened: kernel uses bf16 matmul operands with f32 accumulation)
    phi_ref, rho_ref = _reference(x, params)
    assert phi_out.shape == (B, DIM) and rho_out.shape == (B, 1)
    assert jnp.allclose(phi_out, phi_ref, atol=5e-2, rtol=5e-2)
    assert jnp.allclose(rho_out, rho_ref, atol=5e-2, rtol=5e-2)

    print("KERNEL_OK")
</pallas_src>

<mosaic_0001>
module attributes {stable_mosaic.version = 11 : i64} {
  func.func @_aga_kernel(%arg0: i32, %arg1: memref<8x128xbf16, #tpu.memory_space<vmem>>, %arg2: memref<128x64xbf16, #tpu.memory_space<vmem>>, %arg3: memref<1x64xf32, #tpu.memory_space<vmem>>, %arg4: memref<64x32xbf16, #tpu.memory_space<vmem>>, %arg5: memref<1x32xf32, #tpu.memory_space<vmem>>, %arg6: memref<32x64xbf16, #tpu.memory_space<vmem>>, %arg7: memref<1x64xf32, #tpu.memory_space<vmem>>, %arg8: memref<64x128xbf16, #tpu.memory_space<vmem>>, %arg9: memref<1x128xf32, #tpu.memory_space<vmem>>, %arg10: memref<128x64xbf16, #tpu.memory_space<vmem>>, %arg11: memref<1x64xf32, #tpu.memory_space<vmem>>, %arg12: memref<64x128xbf16, #tpu.memory_space<vmem>>, %arg13: memref<1x128xf32, #tpu.memory_space<vmem>>, %arg14: memref<8x128xf32, #tpu.memory_space<vmem>>, %arg15: memref<8x128xf32, #tpu.memory_space<vmem>>) attributes {dimension_semantics = [#tpu.dimension_semantics<parallel>], iteration_bounds = array<i64: 1>, scalar_prefetch = 0 : i64, scratch_operands = 0 : i64, tpu.core_type = #tpu.core_type<tc>, window_params = [{transform_indices = @transform_0, window_bounds = array<i64: 8, 128>}, {pipeline_mode = #tpu.pipeline_mode<synchronous>, transform_indices = @transform_1, window_bounds = array<i64: 128, 64>}, {pipeline_mode = #tpu.pipeline_mode<synchronous>, transform_indices = @transform_2, window_bounds = array<i64: 1, 64>}, {pipeline_mode = #tpu.pipeline_mode<synchronous>, transform_indices = @transform_3, window_bounds = array<i64: 64, 32>}, {pipeline_mode = #tpu.pipeline_mode<synchronous>, transform_indices = @transform_4, window_bounds = array<i64: 1, 32>}, {pipeline_mode = #tpu.pipeline_mode<synchronous>, transform_indices = @transform_5, window_bounds = array<i64: 32, 64>}, {pipeline_mode = #tpu.pipeline_mode<synchronous>, transform_indices = @transform_6, window_bounds = array<i64: 1, 64>}, {pipeline_mode = #tpu.pipeline_mode<synchronous>, transform_indices = @transform_7, window_bounds = array<i64: 64, 128>}, {pipeline_mode = #tpu.pipeline_mode<synchronous>, transform_indices = @transform_8, window_bounds = array<i64: 1, 128>}, {pipeline_mode = #tpu.pipeline_mode<synchronous>, transform_indices = @transform_9, window_bounds = array<i64: 128, 64>}, {pipeline_mode = #tpu.pipeline_mode<synchronous>, transform_indices = @transform_10, window_bounds = array<i64: 1, 64>}, {pipeline_mode = #tpu.pipeline_mode<synchronous>, transform_indices = @transform_11, window_bounds = array<i64: 64, 128>}, {pipeline_mode = #tpu.pipeline_mode<synchronous>, transform_indices = @transform_12, window_bounds = array<i64: 1, 128>}, {transform_indices = @transform_13, window_bounds = array<i64: 8, 128>}, {transform_indices = @transform_14, window_bounds = array<i64: 8, 128>}]} {
    %c0 = arith.constant 0 : index
    %c0_0 = arith.constant 0 : index
    %0 = vector.load %arg1[%c0, %c0_0] : memref<8x128xbf16, #tpu.memory_space<vmem>>, vector<8x128xbf16>
    %c0_1 = arith.constant 0 : index
    %c0_2 = arith.constant 0 : index
    %1 = vector.load %arg2[%c0_1, %c0_2] : memref<128x64xbf16, #tpu.memory_space<vmem>>, vector<128x64xbf16>
    %cst = arith.constant dense<0.000000e+00> : vector<8x64xf32>
    %2 = tpu.matmul %0, %1, %cst {dimension_numbers = #tpu.dot_dimension_numbers<[1], [0], [0], [1], [0, 0, 1, 1], [], []>} : vector<8x128xbf16>, vector<128x64xbf16>, vector<8x64xf32> -> vector<8x64xf32>
    %c0_3 = arith.constant 0 : index
    %c0_4 = arith.constant 0 : index
    %3 = vector.load %arg3[%c0_3, %c0_4] : memref<1x64xf32, #tpu.memory_space<vmem>>, vector<1x64xf32>
    %4 = vector.broadcast %3 : vector<1x64xf32> to vector<8x64xf32>
    %5 = arith.addf %2, %4 : vector<8x64xf32>
    %cst_5 = arith.constant 0.000000e+00 : f32
    %6 = vector.broadcast %cst_5 : f32 to vector<8x64xf32>
    %7 = arith.maximumf %5, %6 : vector<8x64xf32>
    %8 = arith.truncf %7 : vector<8x64xf32> to vector<8x64xbf16>
    %c0_6 = arith.constant 0 : index
    %c0_7 = arith.constant 0 : index
    %9 = vector.load %arg4[%c0_6, %c0_7] : memref<64x32xbf16, #tpu.memory_space<vmem>>, vector<64x32xbf16>
    %cst_8 = arith.constant dense<0.000000e+00> : vector<8x32xf32>
    %10 = tpu.matmul %8, %9, %cst_8 {dimension_numbers = #tpu.dot_dimension_numbers<[1], [0], [0], [1], [0, 0, 1, 1], [], []>} : vector<8x64xbf16>, vector<64x32xbf16>, vector<8x32xf32> -> vector<8x32xf32>
    %c0_9 = arith.constant 0 : index
    %c0_10 = arith.constant 0 : index
    %11 = vector.load %arg5[%c0_9, %c0_10] : memref<1x32xf32, #tpu.memory_space<vmem>>, vector<1x32xf32>
    %12 = vector.broadcast %11 : vector<1x32xf32> to vector<8x32xf32>
    %13 = arith.addf %10, %12 : vector<8x32xf32>
    %cst_11 = arith.constant 0.000000e+00 : f32
    %14 = vector.broadcast %cst_11 : f32 to vector<8x32xf32>
    %15 = arith.maximumf %13, %14 : vector<8x32xf32>
    %16 = arith.truncf %15 : vector<8x32xf32> to vector<8x32xbf16>
    %c0_12 = arith.constant 0 : index
    %c0_13 = arith.constant 0 : index
    %17 = vector.load %arg6[%c0_12, %c0_13] : memref<32x64xbf16, #tpu.memory_space<vmem>>, vector<32x64xbf16>
    %cst_14 = arith.constant dense<0.000000e+00> : vector<8x64xf32>
    %18 = tpu.matmul %16, %17, %cst_14 {dimension_numbers = #tpu.dot_dimension_numbers<[1], [0], [0], [1], [0, 0, 1, 1], [], []>} : vector<8x32xbf16>, vector<32x64xbf16>, vector<8x64xf32> -> vector<8x64xf32>
    %c0_15 = arith.constant 0 : index
    %c0_16 = arith.constant 0 : index
    %19 = vector.load %arg7[%c0_15, %c0_16] : memref<1x64xf32, #tpu.memory_space<vmem>>, vector<1x64xf32>
    %20 = vector.broadcast %19 : vector<1x64xf32> to vector<8x64xf32>
    %21 = arith.addf %18, %20 : vector<8x64xf32>
    %cst_17 = arith.constant 0.000000e+00 : f32
    %22 = vector.broadcast %cst_17 : f32 to vector<8x64xf32>
    %23 = arith.maximumf %21, %22 : vector<8x64xf32>
    %24 = arith.truncf %23 : vector<8x64xf32> to vector<8x64xbf16>
    %c0_18 = arith.constant 0 : index
    %c0_19 = arith.constant 0 : index
    %25 = vector.load %arg8[%c0_18, %c0_19] : memref<64x128xbf16, #tpu.memory_space<vmem>>, vector<64x128xbf16>
    %cst_20 = arith.constant dense<0.000000e+00> : vector<8x128xf32>
    %26 = tpu.matmul %24, %25, %cst_20 {dimension_numbers = #tpu.dot_dimension_numbers<[1], [0], [0], [1], [0, 0, 1, 1], [], []>} : vector<8x64xbf16>, vector<64x128xbf16>, vector<8x128xf32> -> vector<8x128xf32>
    %c0_21 = arith.constant 0 : index
    %c0_22 = arith.constant 0 : index
    %27 = vector.load %arg9[%c0_21, %c0_22] : memref<1x128xf32, #tpu.memory_space<vmem>>, vector<1x128xf32>
    %28 = vector.broadcast %27 : vector<1x128xf32> to vector<8x128xf32>
    %29 = arith.addf %26, %28 : vector<8x128xf32>
    %cst_23 = arith.constant 0.000000e+00 : f32
    %30 = vector.broadcast %cst_23 : f32 to vector<8x128xf32>
    %31 = arith.maximumf %29, %30 : vector<8x128xf32>
    %c0_24 = arith.constant 0 : index
    %c0_25 = arith.constant 0 : index
    %32 = vector.load %arg14[%c0_24, %c0_25] : memref<8x128xf32, #tpu.memory_space<vmem>>, vector<8x128xf32>
    tpu.vector_store %arg14[%c0_24, %c0_25], %31 {strides = array<i32>} : memref<8x128xf32, #tpu.memory_space<vmem>>, vector<8x128xf32>,
    %33 = arith.truncf %31 : vector<8x128xf32> to vector<8x128xbf16>
    %c0_26 = arith.constant 0 : index
    %c0_27 = arith.constant 0 : index
    %34 = vector.load %arg10[%c0_26, %c0_27] : memref<128x64xbf16, #tpu.memory_space<vmem>>, vector<128x64xbf16>
    %cst_28 = arith.constant dense<0.000000e+00> : vector<8x64xf32>
    %35 = tpu.matmul %33, %34, %cst_28 {dimension_numbers = #tpu.dot_dimension_numbers<[1], [0], [0], [1], [0, 0, 1, 1], [], []>} : vector<8x128xbf16>, vector<128x64xbf16>, vector<8x64xf32> -> vector<8x64xf32>
    %c0_29 = arith.constant 0 : index
    %c0_30 = arith.constant 0 : index
    %36 = vector.load %arg11[%c0_29, %c0_30] : memref<1x64xf32, #tpu.memory_space<vmem>>, vector<1x64xf32>
    %37 = vector.broadcast %36 : vector<1x64xf32> to vector<8x64xf32>
    %38 = arith.addf %35, %37 : vector<8x64xf32>
    %cst_31 = arith.constant 0.000000e+00 : f32
    %39 = vector.broadcast %cst_31 : f32 to vector<8x64xf32>
    %40 = arith.maximumf %38, %39 : vector<8x64xf32>
    %41 = arith.truncf %40 : vector<8x64xf32> to vector<8x64xbf16>
    %c0_32 = arith.constant 0 : index
    %c0_33 = arith.constant 0 : index
    %42 = vector.load %arg12[%c0_32, %c0_33] : memref<64x128xbf16, #tpu.memory_space<vmem>>, vector<64x128xbf16>
    %cst_34 = arith.constant dense<0.000000e+00> : vector<8x128xf32>
    %43 = tpu.matmul %41, %42, %cst_34 {dimension_numbers = #tpu.dot_dimension_numbers<[1], [0], [0], [1], [0, 0, 1, 1], [], []>} : vector<8x64xbf16>, vector<64x128xbf16>, vector<8x128xf32> -> vector<8x128xf32>
    %c0_35 = arith.constant 0 : index
    %c0_36 = arith.constant 0 : index
    %44 = vector.load %arg13[%c0_35, %c0_36] : memref<1x128xf32, #tpu.memory_space<vmem>>, vector<1x128xf32>
    %45 = vector.broadcast %44 : vector<1x128xf32> to vector<8x128xf32>
    %46 = arith.addf %43, %45 : vector<8x128xf32>
    %c0_37 = arith.constant 0 : index
    %c0_38 = arith.constant 0 : index
    %47 = vector.load %arg15[%c0_37, %c0_38] : memref<8x128xf32, #tpu.memory_space<vmem>>, vector<8x128xf32>
    tpu.vector_store %arg15[%c0_37, %c0_38], %46 {strides = array<i32>} : memref<8x128xf32, #tpu.memory_space<vmem>>, vector<8x128xf32>,
    return
  }
  func.func @transform_0(%arg0: i32) -> (i32, i32) {
    %c0_i32 = arith.constant 0 : i32
    %c0_i32_0 = arith.constant 0 : i32
    return %arg0, %c0_i32 : i32, i32
  }
  func.func @transform_1(%arg0: i32) -> (i32, i32) {
    %c0_i32 = arith.constant 0 : i32
    %c0_i32_0 = arith.constant 0 : i32
    %c0_i32_1 = arith.constant 0 : i32
    return %c0_i32, %c0_i32_0 : i32, i32
  }
  func.func @transform_2(%arg0: i32) -> (i32, i32) {
    %c0_i32 = arith.constant 0 : i32
    %c0_i32_0 = arith.constant 0 : i32
    %c0_i32_1 = arith.constant 0 : i32
    return %c0_i32, %c0_i32_0 : i32, i32
  }
  func.func @transform_3(%arg0: i32) -> (i32, i32) {
    %c0_i32 = arith.constant 0 : i32
    %c0_i32_0 = arith.constant 0 : i32
    %c0_i32_1 = arith.constant 0 : i32
    return %c0_i32, %c0_i32_0 : i32, i32
  }
  func.func @transform_4(%arg0: i32) -> (i32, i32) {
    %c0_i32 = arith.constant 0 : i32
    %c0_i32_0 = arith.constant 0 : i32
    %c0_i32_1 = arith.constant 0 : i32
    return %c0_i32, %c0_i32_0 : i32, i32
  }
  func.func @transform_5(%arg0: i32) -> (i32, i32) {
    %c0_i32 = arith.constant 0 : i32
    %c0_i32_0 = arith.constant 0 : i32
    %c0_i32_1 = arith.constant 0 : i32
    return %c0_i32, %c0_i32_0 : i32, i32
  }
  func.func @transform_6(%arg0: i32) -> (i32, i32) {
    %c0_i32 = arith.constant 0 : i32
    %c0_i32_0 = arith.constant 0 : i32
    %c0_i32_1 = arith.constant 0 : i32
    return %c0_i32, %c0_i32_0 : i32, i32
  }
  func.func @transform_7(%arg0: i32) -> (i32, i32) {
    %c0_i32 = arith.constant 0 : i32
    %c0_i32_0 = arith.constant 0 : i32
    %c0_i32_1 = arith.constant 0 : i32
    return %c0_i32, %c0_i32_0 : i32, i32
  }
  func.func @transform_8(%arg0: i32) -> (i32, i32) {
    %c0_i32 = arith.constant 0 : i32
    %c0_i32_0 = arith.constant 0 : i32
    %c0_i32_1 = arith.constant 0 : i32
    return %c0_i32, %c0_i32_0 : i32, i32
  }
  func.func @transform_9(%arg0: i32) -> (i32, i32) {
    %c0_i32 = arith.constant 0 : i32
    %c0_i32_0 = arith.constant 0 : i32
    %c0_i32_1 = arith.constant 0 : i32
    return %c0_i32, %c0_i32_0 : i32, i32
  }
  func.func @transform_10(%arg0: i32) -> (i32, i32) {
    %c0_i32 = arith.constant 0 : i32
    %c0_i32_0 = arith.constant 0 : i32
    %c0_i32_1 = arith.constant 0 : i32
    return %c0_i32, %c0_i32_0 : i32, i32
  }
  func.func @transform_11(%arg0: i32) -> (i32, i32) {
    %c0_i32 = arith.constant 0 : i32
    %c0_i32_0 = arith.constant 0 : i32
    %c0_i32_1 = arith.constant 0 : i32
    return %c0_i32, %c0_i32_0 : i32, i32
  }
  func.func @transform_12(%arg0: i32) -> (i32, i32) {
    %c0_i32 = arith.constant 0 : i32
    %c0_i32_0 = arith.constant 0 : i32
    %c0_i32_1 = arith.constant 0 : i32
    return %c0_i32, %c0_i32_0 : i32, i32
  }
  func.func @transform_13(%arg0: i32) -> (i32, i32) {
    %c0_i32 = arith.constant 0 : i32
    %c0_i32_0 = arith.constant 0 : i32
    return %arg0, %c0_i32 : i32, i32
  }
  func.func @transform_14(%arg0: i32) -> (i32, i32) {
    %c0_i32 = arith.constant 0 : i32
    %c0_i32_0 = arith.constant 0 : i32
    return %arg0, %c0_i32 : i32, i32
  }
}

</mosaic_0001>

<llo_original>
// kernel: tpu_custom_call.1
$region0: #{tpu_custom_call.1}
  #allocation0 [shape = 'u32[]', space=smem, size = 0x4, offset = 0x4, fixed_abs, tag = 'smem constant byte address 0x4 - core index']
  #allocation1 [shape = 'u32[144,128]{1,0:T(1,128)}', space=vmem, size = 0x12000, scoped, tag = 'internal scratch']
  %s0 = inlined_call_operand.vmem [shape: bf16[8,128], index: 0, kind: input, shape index: {}]
  %s1 = inlined_call_operand.vmem [shape: bf16[128,64], index: 1, kind: input, shape index: {}]
  %s2 = inlined_call_operand.vmem [shape: f32[1,64], index: 2, kind: input, shape index: {}]
  %s3 = inlined_call_operand.vmem [shape: bf16[64,32], index: 3, kind: input, shape index: {}]
  %s4 = inlined_call_operand.vmem [shape: f32[1,32], index: 4, kind: input, shape index: {}]
  %s5 = inlined_call_operand.vmem [shape: bf16[32,64], index: 5, kind: input, shape index: {}]
  %s6 = inlined_call_operand.vmem [shape: f32[1,64], index: 6, kind: input, shape index: {}]
  %s7 = inlined_call_operand.vmem [shape: bf16[64,128], index: 7, kind: input, shape index: {}]
  %s8 = inlined_call_operand.vmem [shape: f32[1,128], index: 8, kind: input, shape index: {}]
  %s9 = inlined_call_operand.vmem [shape: bf16[128,64], index: 9, kind: input, shape index: {}]
  %s10 = inlined_call_operand.vmem [shape: f32[1,64], index: 10, kind: input, shape index: {}]
  %s11 = inlined_call_operand.vmem [shape: bf16[64,128], index: 11, kind: input, shape index: {}]
  %s12 = inlined_call_operand.vmem [shape: f32[1,128], index: 12, kind: input, shape index: {}]
  %s13 = inlined_call_operand.hbm [shape: f32[8,128], index: 13, kind: output, shape index: {0}]
  %s14 = inlined_call_operand.hbm [shape: f32[8,128], index: 14, kind: output, shape index: {1}]
  %15 = xla_tuple %s13, %s14
  %s16 = sld [smem:[#allocation0]]
  $region70: #{tpu_custom_call.1} parent=0
    _
  %s18 = ssub.s32 1, %s16
  %s19 = scalar_select 0, %s18, %s16
  $region1: #{tpu_custom_call.1} parent=0
    #allocation2 [shape = 'u8[4096]{0}', space=vmem, size = 0x1000, scoped, tag = 'output window, operand 0, single buffered']
    #allocation3 [shape = 's32[1]{0}', space=sflag, size = 0x4, scoped, tag = 'scoped memory for tpu_custom_call.1']
    #allocation4 [shape = 'u8[4096]{0}', space=vmem, size = 0x1000, scoped, tag = 'output window, operand 1, single buffered']
    #allocation5 [shape = 's32[1]{0}', space=sflag, size = 0x4, scoped, tag = 'scoped memory for tpu_custom_call.1']
    %20 = vsyncpa [#allocation3], 0
    %21 = vsyncpa [#allocation5], 0
    // Predicated region
    $region2: #{tpu_custom_call.1} parent=1 // pred_check
      _
    $region3: #{tpu_custom_call.1} parent=1 // pred_check_branch
      %23 = sbr.rel (0) target = $region5
    $region4: #{tpu_custom_call.1} parent=1 // pred_region
      _
    $region5: #{tpu_custom_call.1} parent=1 // pred_fallthru
      _
    // Predicated region
    $region6: #{tpu_custom_call.1} parent=1 // pred_check
      _
    $region7: #{tpu_custom_call.1} parent=1 // pred_check_branch
      %25 = sbr.rel (0) target = $region9
    $region8: #{tpu_custom_call.1} parent=1 // pred_region
      _
    $region9: #{tpu_custom_call.1} parent=1 // pred_fallthru
      _
    // Predicated region
    $region10: #{tpu_custom_call.1} parent=1 // pred_check
      _
    $region11: #{tpu_custom_call.1} parent=1 // pred_check_branch
      %27 = sbr.rel (0) target = $region13
    $region12: #{tpu_custom_call.1} parent=1 // pred_region
      _
    $region13: #{tpu_custom_call.1} parent=1 // pred_fallthru
      _
    // Predicated region
    $region14: #{tpu_custom_call.1} parent=1 // pred_check
      _
    $region15: #{tpu_custom_call.1} parent=1 // pred_check_branch
      %29 = sbr.rel (0) target = $region17
    $region16: #{tpu_custom_call.1} parent=1 // pred_region
      _
    $region17: #{tpu_custom_call.1} parent=1 // pred_fallthru
      _
    // Predicated region
    $region18: #{tpu_custom_call.1} parent=1 // pred_check
      _
    $region19: #{tpu_custom_call.1} parent=1 // pred_check_branch
      %31 = sbr.rel (0) target = $region21
    $region20: #{tpu_custom_call.1} parent=1 // pred_region
      _
    $region21: #{tpu_custom_call.1} parent=1 // pred_fallthru
      _
    // Predicated region
    $region22: #{tpu_custom_call.1} parent=1 // pred_check
      _
    $region23: #{tpu_custom_call.1} parent=1 // pred_check_branch
      %33 = sbr.rel (0) target = $region25
    $region24: #{tpu_custom_call.1} parent=1 // pred_region
      _
    $region25: #{tpu_custom_call.1} parent=1 // pred_fallthru
      _
    // Predicated region
    $region26: #{tpu_custom_call.1} parent=1 // pred_check
      _
    $region27: #{tpu_custom_call.1} parent=1 // pred_check_branch
      %35 = sbr.rel (0) target = $region29
    $region28: #{tpu_custom_call.1} parent=1 // pred_region
      _
    $region29: #{tpu_custom_call.1} parent=1 // pred_fallthru
      _
    // Predicated region
    $region30: #{tpu_custom_call.1} parent=1 // pred_check
      _
    $region31: #{tpu_custom_call.1} parent=1 // pred_check_branch
      %37 = sbr.rel (0) target = $region33
    $region32: #{tpu_custom_call.1} parent=1 // pred_region
      _
    $region33: #{tpu_custom_call.1} parent=1 // pred_fallthru
      _
    // Predicated region
    $region34: #{tpu_custom_call.1} parent=1 // pred_check
      _
    $region35: #{tpu_custom_call.1} parent=1 // pred_check_branch
      %39 = sbr.rel (0) target = $region37
    $region36: #{tpu_custom_call.1} parent=1 // pred_region
      _
    $region37: #{tpu_custom_call.1} parent=1 // pred_fallthru
      _
    // Predicated region
    $region38: #{tpu_custom_call.1} parent=1 // pred_check
      _
    $region39: #{tpu_custom_call.1} parent=1 // pred_check_branch
      %41 = sbr.rel (0) target = $region41
    $region40: #{tpu_custom_call.1} parent=1 // pred_region
      _
    $region41: #{tpu_custom_call.1} parent=1 // pred_fallthru
      _
    // Predicated region
    $region42: #{tpu_custom_call.1} parent=1 // pred_check
      _
    $region43: #{tpu_custom_call.1} parent=1 // pred_check_branch
      %43 = sbr.rel (0) target = $region45
    $region44: #{tpu_custom_call.1} parent=1 // pred_region
      _
    $region45: #{tpu_custom_call.1} parent=1 // pred_fallthru
      _
    // Predicated region
    $region46: #{tpu_custom_call.1} parent=1 // pred_check
      _
    $region47: #{tpu_custom_call.1} parent=1 // pred_check_branch
      %45 = sbr.rel (0) target = $region49
    $region48: #{tpu_custom_call.1} parent=1 // pred_region
      _
    $region49: #{tpu_custom_call.1} parent=1 // pred_fallthru
      _
    // Predicated region
    $region50: #{tpu_custom_call.1} parent=1 // pred_check
      _
    $region51: #{tpu_custom_call.1} parent=1 // pred_check_branch
      %47 = sbr.rel (0) target = $region53
    $region52: #{tpu_custom_call.1} parent=1 // pred_region
      _
    $region53: #{tpu_custom_call.1} parent=1 // pred_fallthru
      _
    %v49 = vld [vmem:[%s0] sm:$0xf]
    %v50 = vld [vmem:[%s1] sm:$0xf]
    %v51 = vld [vmem:[%s1 + $0x4] sm:$0xf]
    %v52 = vld [vmem:[%s1 + $0x8] sm:$0xf]
    %v53 = vld [vmem:[%s1 + $0xc] sm:$0xf]
    %v54 = vld [vmem:[%s1 + $0x10] sm:$0xf]
    %v55 = vld [vmem:[%s1 + $0x14] sm:$0xf]
    %v56 = vld [vmem:[%s1 + $0x18] sm:$0xf]
    %v57 = vld [vmem:[%s1 + $0x1c] sm:$0xf]
    %v58 = vld [vmem:[%s1 + $0x20] sm:$0xf]
    %v59 = vld [vmem:[%s1 + $0x24] sm:$0xf]
    %v60 = vld [vmem:[%s1 + $0x28] sm:$0xf]
    %v61 = vld [vmem:[%s1 + $0x2c] sm:$0xf]
    %v62 = vld [vmem:[%s1 + $0x30] sm:$0xf]
    %v63 = vld [vmem:[%s1 + $0x34] sm:$0xf]
    %v64 = vld [vmem:[%s1 + $0x38] sm:$0xf]
    %v65 = vld [vmem:[%s1 + $0x3c] sm:$0xf]
    %v66 = vld [vmem:[%s2] sm:$0x1]
    %v68 = vlaneseq
    %v69 = vshrl.u32 %v68, 7
    %v70 = vsub.s32 0, %v69
    %v71 = vrot.slane %v66, %v70
    %v89 = vunpack.c.l.b16 %v50
    %v90 = vunpack.c.l.b16 %v51
    %v91 = vunpack.c.l.b16 %v52
    %v92 = vunpack.c.l.b16 %v53
    %v93 = vunpack.c.l.b16 %v54
    %v94 = vunpack.c.l.b16 %v55
    %v95 = vunpack.c.l.b16 %v56
    %v96 = vunpack.c.l.b16 %v57
    %v97 = vunpack.c.l.b16 %v58
    %v98 = vunpack.c.l.b16 %v59
    %v99 = vunpack.c.l.b16 %v60
    %v100 = vunpack.c.l.b16 %v61
    %v101 = vunpack.c.l.b16 %v62
    %v102 = vunpack.c.l.b16 %v63
    %v103 = vunpack.c.l.b16 %v64
    %v104 = vunpack.c.l.b16 %v65
    %v105 = vpack.c.b16 %v90, %v89
    %v106 = vpack.c.b16 %v92, %v91
    %v107 = vpack.c.b16 %v94, %v93
    %v108 = vpack.c.b16 %v96, %v95
    %v109 = vpack.c.b16 %v98, %v97
    %v110 = vpack.c.b16 %v100, %v99
    %v111 = vpack.c.b16 %v102, %v101
    %v112 = vpack.c.b16 %v104, %v103
    %121 = vmatprep.subr.bf16.mxu0 0
    %122 = vmatpush1.bf16.msra.mxu0 %v112
    %123 = vmatprep.subr.bf16.mxu0 0
    %124 = vmatpush1.bf16.msra.mxu0 %v111
    %125 = vmatprep.subr.bf16.mxu0 0
    %126 = vmatpush1.bf16.msra.mxu0 %v110
    %127 = vmatprep.subr.bf16.mxu0 0
    %128 = vmatpush1.bf16.msra.mxu0 %v109
    %129 = vmatprep.subr.bf16.mxu0 0
    %130 = vmatpush1.bf16.msra.mxu0 %v108
    %131 = vmatprep.subr.bf16.mxu0 0
    %132 = vmatpush1.bf16.msra.mxu0 %v107
    %133 = vmatprep.subr.bf16.mxu0 0
    %134 = vmatpush1.bf16.msra.mxu0 %v106
    %135 = vmatprep.subr.bf16.mxu0 0
    %136 = vmatpush1.bf16.msra.mxu0 %v105
    %137 = vmatprep.subr.bf16.mxu0 0
    %138 = vmatpush2.bf16.msra.mxu0 0
    %139 = vmatprep.subr.bf16.mxu0 0
    %140 = vmatpush2.bf16.msra.mxu0 0
    %141 = vmatprep.subr.bf16.mxu0 0
    %142 = vmatpush2.bf16.msra.mxu0 0
    %143 = vmatprep.subr.bf16.mxu0 0
    %144 = vmatpush2.bf16.msra.mxu0 0
    %145 = vmatprep.subr.bf16.mxu0 0
    %146 = vmatpush2.bf16.msra.mxu0 0
    %147 = vmatprep.subr.bf16.mxu0 0
    %148 = vmatpush2.bf16.msra.mxu0 0
    %149 = vmatprep.subr.bf16.mxu0 0
    %150 = vmatpush2.bf16.msra.mxu0 0
    %151 = vmatprep.subr.bf16.mxu0 0
    %152 = vmatpush2.bf16.msra.mxu0 0
    %153 = vmatprep.mubr.bf16.mxu0 0
    %154 = vmatmul.mubr.bf16.gmra.mxu0 %v49
    %v155 = vpop.f32.mrf.mxu0
    %v156 = vadd.f32 %v71, %v155
    %v157 = vpop.f32.mrf.mxu0
    %v158 = vpop.f32.mrf.mxu0
    %v159 = vpop.f32.mrf.mxu0
    %160 = vdwg.mxu0
    %v161 = vmax.f32 %v156, 0.0
    %v162 = vpack.c.bf16 %v161, %v161
    %v163 = vld [vmem:[%s3] sm:$0xf]
    %v164 = vld [vmem:[%s3 + $0x4] sm:$0xf]
    %v165 = vld [vmem:[%s3 + $0x8] sm:$0xf]
    %v166 = vld [vmem:[%s3 + $0xc] sm:$0xf]
    %v167 = vld [vmem:[%s3 + $0x10] sm:$0xf]
    %v168 = vld [vmem:[%s3 + $0x14] sm:$0xf]
    %v169 = vld [vmem:[%s3 + $0x18] sm:$0xf]
    %v170 = vld [vmem:[%s3 + $0x1c] sm:$0xf]
    %v171 = vld [vmem:[%s4] sm:$0x1]
    %v173 = vlaneseq
    %v174 = vshrl.u32 %v173, 7
    %v175 = vsub.s32 0, %v174
    %v176 = vrot.slane %v171, %v175
    %v186 = vunpack.c.l.b16 %v163
    %v187 = vunpack.c.l.b16 %v164
    %v188 = vunpack.c.l.b16 %v165
    %v189 = vunpack.c.l.b16 %v166
    %v190 = vunpack.c.l.b16 %v167
    %v191 = vunpack.c.l.b16 %v168
    %v192 = vunpack.c.l.b16 %v169
    %v193 = vunpack.c.l.b16 %v170
    %v194 = vpack.c.b16 %v187, %v186
    %v195 = vpack.c.b16 %v189, %v188
    %v196 = vpack.c.b16 %v191, %v190
    %v197 = vpack.c.b16 %v193, %v192
    %vm202 = vcmask 523264
    %v204 = vsel %vm202, %v162, 0
    %206 = vmatprep.subr.bf16.mxu0 0
    %207 = vmatpush1.bf16.msra.mxu0 0
    %208 = vmatprep.subr.bf16.mxu0 0
    %209 = vmatpush1.bf16.msra.mxu0 0
    %210 = vmatprep.subr.bf16.mxu0 0
    %211 = vmatpush1.bf16.msra.mxu0 0
    %212 = vmatprep.subr.bf16.mxu0 0
    %213 = vmatpush1.bf16.msra.mxu0 0
    %214 = vmatprep.subr.bf16.mxu0 0
    %215 = vmatpush1.bf16.msra.mxu0 %v197
    %216 = vmatprep.subr.bf16.mxu0 0
    %217 = vmatpush1.bf16.msra.mxu0 %v196
    %218 = vmatprep.subr.bf16.mxu0 0
    %219 = vmatpush1.bf16.msra.mxu0 %v195
    %220 = vmatprep.subr.bf16.mxu0 0
    %221 = vmatpush1.bf16.msra.mxu0 %v194
    %222 = vmatprep.subr.bf16.mxu0 0
    %223 = vmatpush2.bf16.msra.mxu0 0
    %224 = vmatprep.subr.bf16.mxu0 0
    %225 = vmatpush2.bf16.msra.mxu0 0
    %226 = vmatprep.subr.bf16.mxu0 0
    %227 = vmatpush2.bf16.msra.mxu0 0
    %228 = vmatprep.subr.bf16.mxu0 0
    %229 = vmatpush2.bf16.msra.mxu0 0
    %230 = vmatprep.subr.bf16.mxu0 0
    %231 = vmatpush2.bf16.msra.mxu0 0
    %232 = vmatprep.subr.bf16.mxu0 0
    %233 = vmatpush2.bf16.msra.mxu0 0
    %234 = vmatprep.subr.bf16.mxu0 0
    %235 = vmatpush2.bf16.msra.mxu0 0
    %236 = vmatprep.subr.bf16.mxu0 0
    %237 = vmatpush2.bf16.msra.mxu0 0
    %238 = vmatprep.mubr.bf16.mxu0 0
    %239 = vmatmul.mubr.bf16.gmra.mxu0 %v204
    %v240 = vpop.f32.mrf.mxu0
    %v241 = vadd.f32 %v176, %v240
    %v242 = vpop.f32.mrf.mxu0
    %v243 = vpop.f32.mrf.mxu0
    %v244 = vpop.f32.mrf.mxu0
    %245 = vdwg.mxu0
    %v246 = vmax.f32 %v241, 0.0
    %v247 = vpack.c.bf16 %v246, %v246
    %v248 = vld [vmem:[%s5] sm:$0xf]
    %v249 = vld [vmem:[%s5 + $0x4] sm:$0xf]
    %v250 = vld [vmem:[%s5 + $0x8] sm:$0xf]
    %v251 = vld [vmem:[%s5 + $0xc] sm:$0xf]
    %v252 = vld [vmem:[%s6] sm:$0x1]
    %v254 = vlaneseq
    %v255 = vshrl.u32 %v254, 7
    %v256 = vsub.s32 0, %v255
    %v257 = vrot.slane %v252, %v256
    %v263 = vunpack.c.l.b16 %v248
    %v264 = vunpack.c.l.b16 %v249
    %v265 = vunpack.c.l.b16 %v250
    %v266 = vunpack.c.l.b16 %v251
    %v267 = vpack.c.b16 %v264, %v263
    %v268 = vpack.c.b16 %v266, %v265
    %vm271 = vcmask 261120
    %v273 = vsel %vm271, %v247, 0
    %275 = vmatprep.subr.bf16.mxu0 0
    %276 = vmatpush1.bf16.msra.mxu0 0
    %277 = vmatprep.subr.bf16.mxu0 0
    %278 = vmatpush1.bf16.msra.mxu0 0
    %279 = vmatprep.subr.bf16.mxu0 0
    %280 = vmatpush1.bf16.msra.mxu0 0
    %281 = vmatprep.subr.bf16.mxu0 0
    %282 = vmatpush1.bf16.msra.mxu0 0
    %283 = vmatprep.subr.bf16.mxu0 0
    %284 = vmatpush1.bf16.msra.mxu0 0
    %285 = vmatprep.subr.bf16.mxu0 0
    %286 = vmatpush1.bf16.msra.mxu0 0
    %287 = vmatprep.subr.bf16.mxu0 0
    %288 = vmatpush1.bf16.msra.mxu0 %v268
    %289 = vmatprep.subr.bf16.mxu0 0
    %290 = vmatpush1.bf16.msra.mxu0 %v267
    %291 = vmatprep.subr.bf16.mxu0 0
    %292 = vmatpush2.bf16.msra.mxu0 0
    %293 = vmatprep.subr.bf16.mxu0 0
    %294 = vmatpush2.bf16.msra.mxu0 0
    %295 = vmatprep.subr.bf16.mxu0 0
    %296 = vmatpush2.bf16.msra.mxu0 0
    %297 = vmatprep.subr.bf16.mxu0 0
    %298 = vmatpush2.bf16.msra.mxu0 0
    %299 = vmatprep.subr.bf16.mxu0 0
    %300 = vmatpush2.bf16.msra.mxu0 0
    %301 = vmatprep.subr.bf16.mxu0 0
    %302 = vmatpush2.bf16.msra.mxu0 0
    %303 = vmatprep.subr.bf16.mxu0 0
    %304 = vmatpush2.bf16.msra.mxu0 0
    %305 = vmatprep.subr.bf16.mxu0 0
    %306 = vmatpush2.bf16.msra.mxu0 0
    %307 = vmatprep.mubr.bf16.mxu0 0
    %308 = vmatmul.mubr.bf16.gmra.mxu0 %v273
    %v309 = vpop.f32.mrf.mxu0
    %v310 = vadd.f32 %v257, %v309
    %v311 = vpop.f32.mrf.mxu0
    %v312 = vpop.f32.mrf.mxu0
    %v313 = vpop.f32.mrf.mxu0
    %314 = vdwg.mxu0
    %v315 = vmax.f32 %v310, 0.0
    %v316 = vpack.c.bf16 %v315, %v315
    %v317 = vld [vmem:[%s7] sm:$0xf]
    %v318 = vld [vmem:[%s7 + $0x4] sm:$0xf]
    %v319 = vld [vmem:[%s7 + $0x8] sm:$0xf]
    %v320 = vld [vmem:[%s7 + $0xc] sm:$0xf]
    %v321 = vld [vmem:[%s7 + $0x10] sm:$0xf]
    %v322 = vld [vmem:[%s7 + $0x14] sm:$0xf]
    %v323 = vld [vmem:[%s7 + $0x18] sm:$0xf]
    %v324 = vld [vmem:[%s7 + $0x1c] sm:$0xf]
    %v325 = vld [vmem:[%s8] sm:$0x1]
    %v327 = vlaneseq
    %v328 = vshrl.u32 %v327, 7
    %v329 = vsub.s32 0, %v328
    %v330 = vrot.slane %v325, %v329
    %v340 = vunpack.c.l.b16 %v317
    %v341 = vunpack.c.l.b16 %v318
    %v342 = vunpack.c.l.b16 %v319
    %v343 = vunpack.c.l.b16 %v320
    %v344 = vunpack.c.l.b16 %v321
    %v345 = vunpack.c.l.b16 %v322
    %v346 = vunpack.c.l.b16 %v323
    %v347 = vunpack.c.l.b16 %v324
    %v348 = vpack.c.b16 %v341, %v340
    %v349 = vpack.c.b16 %v343, %v342
    %v350 = vpack.c.b16 %v345, %v344
    %v351 = vpack.c.b16 %v347, %v346
    %v357 = vsel %vm202, %v316, 0
    %359 = vmatprep.subr.bf16.mxu0 0
    %360 = vmatpush1.bf16.msra.mxu0 0
    %361 = vmatprep.subr.bf16.mxu0 0
    %362 = vmatpush1.bf16.msra.mxu0 0
    %363 = vmatprep.subr.bf16.mxu0 0
    %364 = vmatpush1.bf16.msra.mxu0 0
    %365 = vmatprep.subr.bf16.mxu0 0
    %366 = vmatpush1.bf16.msra.mxu0 0
    %367 = vmatprep.subr.bf16.mxu0 0
    %368 = vmatpush1.bf16.msra.mxu0 %v351
    %369 = vmatprep.subr.bf16.mxu0 0
    %370 = vmatpush1.bf16.msra.mxu0 %v350
    %371 = vmatprep.subr.bf16.mxu0 0
    %372 = vmatpush1.bf16.msra.mxu0 %v349
    %373 = vmatprep.subr.bf16.mxu0 0
    %374 = vmatpush1.bf16.msra.mxu0 %v348
    %375 = vmatprep.subr.bf16.mxu0 0
    %376 = vmatpush2.bf16.msra.mxu0 0
    %377 = vmatprep.subr.bf16.mxu0 0
    %378 = vmatpush2.bf16.msra.mxu0 0
    %379 = vmatprep.subr.bf16.mxu0 0
    %380 = vmatpush2.bf16.msra.mxu0 0
    %381 = vmatprep.subr.bf16.mxu0 0
    %382 = vmatpush2.bf16.msra.mxu0 0
    %383 = vmatprep.subr.bf16.mxu0 0
    %384 = vmatpush2.bf16.msra.mxu0 0
    %385 = vmatprep.subr.bf16.mxu0 0
    %386 = vmatpush2.bf16.msra.mxu0 0
    %387 = vmatprep.subr.bf16.mxu0 0
    %388 = vmatpush2.bf16.msra.mxu0 0
    %389 = vmatprep.subr.bf16.mxu0 0
    %390 = vmatpush2.bf16.msra.mxu0 0
    %391 = vmatprep.mubr.bf16.mxu0 0
    %392 = vmatmul.mubr.bf16.gmra.mxu0 %v357
    %v393 = vpop.f32.mrf.mxu0
    %v394 = vadd.f32 %v330, %v393
    %v395 = vpop.f32.mrf.mxu0
    %v396 = vpop.f32.mrf.mxu0
    %v397 = vpop.f32.mrf.mxu0
    %398 = vdwg.mxu0
    %v399 = vmax.f32 %v394, 0.0
    %400 = vst [vmem:[#allocation2] sm:$0xff] %v399
    %v401 = vpack.c.bf16 %v399, %v399
    %v402 = vld [vmem:[%s9] sm:$0xf]
    %v403 = vld [vmem:[%s9 + $0x4] sm:$0xf]
    %v404 = vld [vmem:[%s9 + $0x8] sm:$0xf]
    %v405 = vld [vmem:[%s9 + $0xc] sm:$0xf]
    %v406 = vld [vmem:[%s9 + $0x10] sm:$0xf]
    %v407 = vld [vmem:[%s9 + $0x14] sm:$0xf]
    %v408 = vld [vmem:[%s9 + $0x18] sm:$0xf]
    %v409 = vld [vmem:[%s9 + $0x1c] sm:$0xf]
    %v410 = vld [vmem:[%s9 + $0x20] sm:$0xf]
    %v411 = vld [vmem:[%s9 + $0x24] sm:$0xf]
    %v412 = vld [vmem:[%s9 + $0x28] sm:$0xf]
    %v413 = vld [vmem:[%s9 + $0x2c] sm:$0xf]
    %v414 = vld [vmem:[%s9 + $0x30] sm:$0xf]
    %v415 = vld [vmem:[%s9 + $0x34] sm:$0xf]
    %v416 = vld [vmem:[%s9 + $0x38] sm:$0xf]
    %v417 = vld [vmem:[%s9 + $0x3c] sm:$0xf]
    %v418 = vld [vmem:[%s10] sm:$0x1]
    %v420 = vlaneseq
    %v421 = vshrl.u32 %v420, 7
    %v422 = vsub.s32 0, %v421
    %v423 = vrot.slane %v418, %v422
    %v441 = vunpack.c.l.b16 %v402
    %v442 = vunpack.c.l.b16 %v403
    %v443 = vunpack.c.l.b16 %v404
    %v444 = vunpack.c.l.b16 %v405
    %v445 = vunpack.c.l.b16 %v406
    %v446 = vunpack.c.l.b16 %v407
    %v447 = vunpack.c.l.b16 %v408
    %v448 = vunpack.c.l.b16 %v409
    %v449 = vunpack.c.l.b16 %v410
    %v450 = vunpack.c.l.b16 %v411
    %v451 = vunpack.c.l.b16 %v412
    %v452 = vunpack.c.l.b16 %v413
    %v453 = vunpack.c.l.b16 %v414
    %v454 = vunpack.c.l.b16 %v415
    %v455 = vunpack.c.l.b16 %v416
    %v456 = vunpack.c.l.b16 %v417
    %v457 = vpack.c.b16 %v442, %v441
    %v458 = vpack.c.b16 %v444, %v443
    %v459 = vpack.c.b16 %v446, %v445
    %v460 = vpack.c.b16 %v448, %v447
    %v461 = vpack.c.b16 %v450, %v449
    %v462 = vpack.c.b16 %v452, %v451
    %v463 = vpack.c.b16 %v454, %v453
    %v464 = vpack.c.b16 %v456, %v455
    %473 = vmatprep.subr.bf16.mxu0 0
    %474 = vmatpush1.bf16.msra.mxu0 %v464
    %475 = vmatprep.subr.bf16.mxu0 0
    %476 = vmatpush1.bf16.msra.mxu0 %v463
    %477 = vmatprep.subr.bf16.mxu0 0
    %478 = vmatpush1.bf16.msra.mxu0 %v462
    %479 = vmatprep.subr.bf16.mxu0 0
    %480 = vmatpush1.bf16.msra.mxu0 %v461
    %481 = vmatprep.subr.bf16.mxu0 0
    %482 = vmatpush1.bf16.msra.mxu0 %v460
    %483 = vmatprep.subr.bf16.mxu0 0
    %484 = vmatpush1.bf16.msra.mxu0 %v459
    %485 = vmatprep.subr.bf16.mxu0 0
    %486 = vmatpush1.bf16.msra.mxu0 %v458
    %487 = vmatprep.subr.bf16.mxu0 0
    %488 = vmatpush1.bf16.msra.mxu0 %v457
    %489 = vmatprep.subr.bf16.mxu0 0
    %490 = vmatpush2.bf16.msra.mxu0 0
    %491 = vmatprep.subr.bf16.mxu0 0
    %492 = vmatpush2.bf16.msra.mxu0 0
    %493 = vmatprep.subr.bf16.mxu0 0
    %494 = vmatpush2.bf16.msra.mxu0 0
    %495 = vmatprep.subr.bf16.mxu0 0
    %496 = vmatpush2.bf16.msra.mxu0 0
    %497 = vmatprep.subr.bf16.mxu0 0
    %498 = vmatpush2.bf16.msra.mxu0 0
    %499 = vmatprep.subr.bf16.mxu0 0
    %500 = vmatpush2.bf16.msra.mxu0 0
    %501 = vmatprep.subr.bf16.mxu0 0
    %502 = vmatpush2.bf16.msra.mxu0 0
    %503 = vmatprep.subr.bf16.mxu0 0
    %504 = vmatpush2.bf16.msra.mxu0 0
    %505 = vmatprep.mubr.bf16.mxu0 0
    %506 = vmatmul.mubr.bf16.gmra.mxu0 %v401
    %v507 = vpop.f32.mrf.mxu0
    %v508 = vadd.f32 %v423, %v507
    %v509 = vpop.f32.mrf.mxu0
    %v510 = vpop.f32.mrf.mxu0
    %v511 = vpop.f32.mrf.mxu0
    %512 = vdwg.mxu0
    %v513 = vmax.f32 %v508, 0.0
    %v514 = vpack.c.bf16 %v513, %v513
    %v515 = vld [vmem:[%s11] sm:$0xf]
    %v516 = vld [vmem:[%s11 + $0x4] sm:$0xf]
    %v517 = vld [vmem:[%s11 + $0x8] sm:$0xf]
    %v518 = vld [vmem:[%s11 + $0xc] sm:$0xf]
    %v519 = vld [vmem:[%s11 + $0x10] sm:$0xf]
    %v520 = vld [vmem:[%s11 + $0x14] sm:$0xf]
    %v521 = vld [vmem:[%s11 + $0x18] sm:$0xf]
    %v522 = vld [vmem:[%s11 + $0x1c] sm:$0xf]
    %v523 = vld [vmem:[%s12] sm:$0x1]
    %v525 = vlaneseq
    %v526 = vshrl.u32 %v525, 7
    %v527 = vsub.s32 0, %v526
    %v528 = vrot.slane %v523, %v527
    %v538 = vunpack.c.l.b16 %v515
    %v539 = vunpack.c.l.b16 %v516
    %v540 = vunpack.c.l.b16 %v517
    %v541 = vunpack.c.l.b16 %v518
    %v542 = vunpack.c.l.b16 %v519
    %v543 = vunpack.c.l.b16 %v520
    %v544 = vunpack.c.l.b16 %v521
    %v545 = vunpack.c.l.b16 %v522
    %v546 = vpack.c.b16 %v539, %v538
    %v547 = vpack.c.b16 %v541, %v540
    %v548 = vpack.c.b16 %v543, %v542
    %v549 = vpack.c.b16 %v545, %v544
    %v555 = vsel %vm202, %v514, 0
    %557 = vmatprep.subr.bf16.mxu0 0
    %558 = vmatpush1.bf16.msra.mxu0 0
    %559 = vmatprep.subr.bf16.mxu0 0
    %560 = vmatpush1.bf16.msra.mxu0 0
    %561 = vmatprep.subr.bf16.mxu0 0
    %562 = vmatpush1.bf16.msra.mxu0 0
    %563 = vmatprep.subr.bf16.mxu0 0
    %564 = vmatpush1.bf16.msra.mxu0 0
    %565 = vmatprep.subr.bf16.mxu0 0
    %566 = vmatpush1.bf16.msra.mxu0 %v549
    %567 = vmatprep.subr.bf16.mxu0 0
    %568 = vmatpush1.bf16.msra.mxu0 %v548
    %569 = vmatprep.subr.bf16.mxu0 0
    %570 = vmatpush1.bf16.msra.mxu0 %v547
    %571 = vmatprep.subr.bf16.mxu0 0
    %572 = vmatpush1.bf16.msra.mxu0 %v546
    %573 = vmatprep.subr.bf16.mxu0 0
    %574 = vmatpush2.bf16.msra.mxu0 0
    %575 = vmatprep.subr.bf16.mxu0 0
    %576 = vmatpush2.bf16.msra.mxu0 0
    %577 = vmatprep.subr.bf16.mxu0 0
    %578 = vmatpush2.bf16.msra.mxu0 0
    %579 = vmatprep.subr.bf16.mxu0 0
    %580 = vmatpush2.bf16.msra.mxu0 0
    %581 = vmatprep.subr.bf16.mxu0 0
    %582 = vmatpush2.bf16.msra.mxu0 0
    %583 = vmatprep.subr.bf16.mxu0 0
    %584 = vmatpush2.bf16.msra.mxu0 0
    %585 = vmatprep.subr.bf16.mxu0 0
    %586 = vmatpush2.bf16.msra.mxu0 0
    %587 = vmatprep.subr.bf16.mxu0 0
    %588 = vmatpush2.bf16.msra.mxu0 0
    %589 = vmatprep.mubr.bf16.mxu0 0
    %590 = vmatmul.mubr.bf16.gmra.mxu0 %v555
    %v591 = vpop.f32.mrf.mxu0
    %v592 = vadd.f32 %v528, %v591
    %v593 = vpop.f32.mrf.mxu0
    %v594 = vpop.f32.mrf.mxu0
    %v595 = vpop.f32.mrf.mxu0
    %596 = vdwg.mxu0
    %597 = vst [vmem:[#allocation4] sm:$0xff] %v592
    // Predicated region
    $region54: #{tpu_custom_call.1} parent=1 // pred_check
      _
    $region55: #{tpu_custom_call.1} parent=1 // pred_check_branch
      %599 = sbr.rel (0) target = $region57
    $region56: #{tpu_custom_call.1} parent=1 // pred_region
      %s601 = ssub.s32 128, 128
      %602 = vsyncadd [#allocation3], %s601
      %s604 = sshll.u32 [#allocation2], 4
      %s605 = int_to_ptr.vmem [resolvable:$true] %s604
      %607 = dma.vmem_to_hbm [thread:$0]  %s605, 128, %s13, [#allocation3]
    $region57: #{tpu_custom_call.1} parent=1 // pred_fallthru
      _
    // Predicated region
    $region58: #{tpu_custom_call.1} parent=1 // pred_check
      _
    $region59: #{tpu_custom_call.1} parent=1 // pred_check_branch
      %609 = sbr.rel (0) target = $region61
    $region60: #{tpu_custom_call.1} parent=1 // pred_region
      %s611 = ssub.s32 128, 128
      %612 = vsyncadd [#allocation5], %s611
      %s614 = sshll.u32 [#allocation4], 4
      %s615 = int_to_ptr.vmem [resolvable:$true] %s614
      %617 = dma.vmem_to_hbm [thread:$0]  %s615, 128, %s14, [#allocation5]
    $region61: #{tpu_custom_call.1} parent=1 // pred_fallthru
      _
    // Predicated region
    $region62: #{tpu_custom_call.1} parent=1 // pred_check
      _
    $region63: #{tpu_custom_call.1} parent=1 // pred_check_branch
      %619 = sbr.rel (0) target = $region65
    $region64: #{tpu_custom_call.1} parent=1 // pred_region
      %620 = dma.done [#allocation3], 128
    $region65: #{tpu_custom_call.1} parent=1 // pred_fallthru
      _
    // Predicated region
    $region66: #{tpu_custom_call.1} parent=1 // pred_check
      _
    $region67: #{tpu_custom_call.1} parent=1 // pred_check_branch
      %622 = sbr.rel (0) target = $region69
    $region68: #{tpu_custom_call.1} parent=1 // pred_region
      %623 = dma.done [#allocation5], 128
    $region69: #{tpu_custom_call.1} parent=1 // pred_fallthru
      _
    %624 = vsyncpa [#allocation3], 1
    %625 = vsyncpa [#allocation5], 1

</llo_original>
